<compile_context>
chip_gen: v7x
topology: tpu7x:2x2x1
jax: 0.10.0
libtpu: 0.0.40
codegen_flags: <defaults>
</compile_context>

<pallas_src>
import functools

import jax
import jax.numpy as jnp
from jax.experimental import pallas as pl
from jax.experimental.pallas import tpu as pltpu


def _round_up(x, m):
    return (x + m - 1) // m * m


def _cdiv(a, b):
    return (a + b - 1) // b


def _fit_tile(dim, requested, granule):
    """Tile <= requested (granule-aligned) chosen so the padded extent exceeds
    `dim` by at most ~one granule per block (avoids 2x zero-pad blowup)."""
    padded = _round_up(max(dim, 1), granule)
    t = max(granule, min(_round_up(requested, granule), padded))
    nblocks = _cdiv(padded, t)
    return _round_up(_cdiv(padded, nblocks), granule)


def _tpu_vmem_bytes():
    try:
        return int(pltpu.get_tpu_info().vmem_capacity_bytes)
    except Exception:
        return 64 * 1024 * 1024  # conservative (v7x-sized) fallback


# ------------------------------ kernels ------------------------------------ #

def _kernel_acc_in_out(x_ref, wt_ref, o_ref, *, factor):
    """f32 output: accumulate directly into the K-resident output block."""
    @pl.when(pl.program_id(2) == 0)
    def _():
        o_ref[...] = jnp.zeros_like(o_ref)

    o_ref[...] += jnp.dot(x_ref[...], wt_ref[...],
                          preferred_element_type=jnp.float32)

    if factor != 1.0:
        @pl.when(pl.program_id(2) == pl.num_programs(2) - 1)
        def _():
            o_ref[...] *= factor


def _kernel_scratch_acc(x_ref, wt_ref, o_ref, acc_ref, *, factor):
    """Non-f32 output: accumulate in an f32 VMEM scratch, cast at finalize."""
    @pl.when(pl.program_id(2) == 0)
    def _():
        acc_ref[...] = jnp.zeros_like(acc_ref)

    acc_ref[...] += jnp.dot(x_ref[...], wt_ref[...],
                            preferred_element_type=jnp.float32)

    @pl.when(pl.program_id(2) == pl.num_programs(2) - 1)
    def _():
        r = acc_ref[...]
        if factor != 1.0:
            r = r * factor
        o_ref[...] = r.astype(o_ref.dtype)


# ------------------------------ wrapper ------------------------------------ #

def linear_estimator(x, weight, factor=1.0, *, tm=None, tn=None, tk=None):
    """y = (x @ weight.T) * factor ; weight shaped (out_c, in_c) like nn.Linear."""
    orig_shape = x.shape
    in_c = orig_shape[-1]
    out_c, in_c_w = weight.shape
    assert in_c == in_c_w, "weight last dim must match x last dim"

    x2 = x.reshape(-1, in_c)
    B = x2.shape[0]

    x_bytes = jnp.dtype(x.dtype).itemsize
    w_bytes = jnp.dtype(weight.dtype).itemsize
    o_dtype = jnp.dtype(x.dtype)
    o_bytes = o_dtype.itemsize
    accumulate_in_out = (o_dtype == jnp.dtype(jnp.float32))

    sub = max(8, 32 // x_bytes)  # sublane granule: 8 (f32), 16 (bf16), 32 (i8)

    # --- per-generation VMEM budgets / default tiles ---
    vmem_phys = _tpu_vmem_bytes()
    if vmem_phys >= 100 * 1024 * 1024:           # v5e / v6e: 128 MiB VMEM
        vmem_cap, tile_budget = 100 << 20, 80 << 20
        def_tm, def_tn, def_tk = 1024, 1024, 2048
    else:                                        # v7x: 64 MiB per TensorCore
        vmem_cap, tile_budget = 48 << 20, 36 << 20
        def_tm, def_tn, def_tk = 512, 1024, 2048

    tm = def_tm if tm is None else tm
    tn = def_tn if tn is None else tn
    tk = def_tk if tk is None else tk

    # --- pad-aware tile selection ---
    tm = _fit_tile(B, tm, sub)
    tk = _fit_tile(in_c, tk, 128)
    np128 = _round_up(out_c, 128)
    if np128 <= 2048:
        tn = np128                      # single N block -> x streamed from HBM once
    else:
        tn = _fit_tile(out_c, tn, 128)

    def footprint(tm_, tn_, tk_):
        f = (2 * tm_ * tk_ * x_bytes        # double-buffered x tile
             + 2 * tk_ * tn_ * w_bytes      # double-buffered W.T tile
             + 2 * tm_ * tn_ * o_bytes)     # double-buffered out tile
        if not accumulate_in_out:
            f += tm_ * tn_ * 4              # f32 scratch accumulator
        return f

    # Shrink tiles (K first, then M, then N) until resident set fits the budget.
    while footprint(tm, tn, tk) > tile_budget:
        if tk >= 256:
            tk = _round_up(tk // 2, 128)
        elif tm >= 2 * sub:
            tm = _round_up(tm // 2, sub)
        elif tn >= 256:
            tn = _round_up(tn // 2, 128)
        else:
            break

    Mp = _round_up(B, tm)
    Np = _round_up(out_c, tn)
    Kp = _round_up(in_c, tk)

    # Guarantee >= 2 parallel (i, j) blocks so both v7x TensorCores have work.
    if (Mp // tm) * (Np // tn) == 1 and B > sub and tm >= 2 * sub:
        tm = _round_up(_cdiv(tm, 2), sub)
        Mp = _round_up(B, tm)

    # --- pad operands (zero K-padding does not change the contraction) ---
    if (Mp, Kp) != (B, in_c):
        x2 = jnp.pad(x2, ((0, Mp - B), (0, Kp - in_c)))
    wt = weight.T                                # one-time (in_c, out_c) layout
    if (Kp, Np) != (in_c, out_c):
        wt = jnp.pad(wt, ((0, Kp - in_c), (0, Np - out_c)))

    grid = (Mp // tm, Np // tn, Kp // tk)

    vmem_limit = int(min(max(int(footprint(tm, tn, tk) * 1.25), 32 << 20), vmem_cap))

    if accumulate_in_out:
        kernel = functools.partial(_kernel_acc_in_out, factor=float(factor))
        scratch = []
    else:
        kernel = functools.partial(_kernel_scratch_acc, factor=float(factor))
        scratch = [pltpu.VMEM((tm, tn), jnp.float32)]

    out = pl.pallas_call(
        kernel,
        out_shape=jax.ShapeDtypeStruct((Mp, Np), o_dtype),
        grid_spec=pltpu.PrefetchScalarGridSpec(
            num_scalar_prefetch=0,
            grid=grid,
            in_specs=[
                pl.BlockSpec((tm, tk), lambda i, j, k: (i, k)),  # x rows
                pl.BlockSpec((tk, tn), lambda i, j, k: (k, j)),  # W.T (in_c,out_c)
            ],
            out_specs=pl.BlockSpec((tm, tn), lambda i, j, k: (i, j)),
            scratch_shapes=scratch,
        ),
        compiler_params=pltpu.CompilerParams(
            dimension_semantics=("parallel", "parallel", "arbitrary"),
            vmem_limit_bytes=vmem_limit,
        ),
        cost_estimate=pl.CostEstimate(
            flops=2 * Mp * Np * Kp,
            transcendentals=0,
            bytes_accessed=Mp * Kp * x_bytes + Kp * Np * w_bytes + Mp * Np * o_bytes,
        ),
    )(x2, wt)

    out = out[:B, :out_c]
    return out.reshape(*orig_shape[:-1], out_c)


if __name__ == "__main__":
    key = jax.random.PRNGKey(0)

    # Case 1: small shapes consistent with LinearEstimator(in_c, out_c).
    B, in_c, out_c = 8, 32, 16
    factor = 0.5
    kx, kw, kx2, kw2 = jax.random.split(key, 4)
    x = jax.random.normal(kx, (B, in_c), dtype=jnp.float32)
    bound = 1.0 / (in_c ** 0.5)
    weight = jax.random.uniform(
        kw, (out_c, in_c), minval=-bound, maxval=bound, dtype=jnp.float32
    )
    y = jax.block_until_ready(linear_estimator(x, weight, factor))
    y_ref = (x @ weight.T) * factor
    assert y.shape == (B, out_c)
    assert jnp.allclose(y, y_ref, atol=1e-5, rtol=1e-5)

    # Case 2: non-aligned shapes to exercise the padding / slicing path.
    B2, in_c2, out_c2 = 5, 20, 3
    x2 = jax.random.normal(kx2, (B2, in_c2), dtype=jnp.float32)
    w2 = jax.random.normal(kw2, (out_c2, in_c2), dtype=jnp.float32) * 0.1
    y2 = jax.block_until_ready(linear_estimator(x2, w2, 1.25))
    y2_ref = (x2 @ w2.T) * 1.25
    assert y2.shape == (B2, out_c2)
    assert jnp.allclose(y2, y2_ref, atol=1e-5, rtol=1e-5)

    # Case 3: 3-D input (batched sequence) to exercise leading-dim flattening.
    x3 = jax.random.normal(kx, (2, 8, 32), dtype=jnp.float32)
    y3 = jax.block_until_ready(linear_estimator(x3, weight, factor))
    y3_ref = jnp.einsum("bsd,od->bso", x3, weight) * factor
    assert y3.shape == (2, 8, out_c)
    assert jnp.allclose(y3, y3_ref, atol=1e-5, rtol=1e-5)

    print("KERNEL_OK")
</pallas_src>

<mosaic_0001>
module attributes {stable_mosaic.version = 11 : i64} {
  func.func @_kernel_acc_in_out(%arg0: i32, %arg1: i32, %arg2: i32, %arg3: memref<8x128xf32, #tpu.memory_space<vmem>>, %arg4: memref<128x128xf32, #tpu.memory_space<vmem>>, %arg5: memref<8x128xf32, #tpu.memory_space<vmem>>) attributes {dimension_semantics = [#tpu.dimension_semantics<parallel>, #tpu.dimension_semantics<parallel>, #tpu.dimension_semantics<arbitrary>], iteration_bounds = array<i64: 1, 1, 1>, scalar_prefetch = 0 : i64, scratch_operands = 0 : i64, tpu.core_type = #tpu.core_type<tc>, window_params = [{transform_indices = @transform_0, window_bounds = array<i64: 8, 128>}, {transform_indices = @transform_1, window_bounds = array<i64: 128, 128>}, {transform_indices = @transform_2, window_bounds = array<i64: 8, 128>}]} {
    %c0_i32 = arith.constant 0 : i32
    %0 = arith.cmpi eq, %arg2, %c0_i32 : i32
    %1 = arith.extui %0 : i1 to i32
    %c0_i32_0 = arith.constant 0 : i32
    %2 = arith.cmpi ne, %1, %c0_i32_0 : i32
    scf.if %2 {
      %cst_10 = arith.constant 0.000000e+00 : f32
      %12 = vector.broadcast %cst_10 : f32 to vector<8x128xf32>
      %c0_11 = arith.constant 0 : index
      %c0_12 = arith.constant 0 : index
      %13 = vector.load %arg5[%c0_11, %c0_12] : memref<8x128xf32, #tpu.memory_space<vmem>>, vector<8x128xf32>
      tpu.vector_store %arg5[%c0_11, %c0_12], %12 {strides = array<i32>} : memref<8x128xf32, #tpu.memory_space<vmem>>, vector<8x128xf32>,
    } else {
    }
    %c0 = arith.constant 0 : index
    %c0_1 = arith.constant 0 : index
    %3 = vector.load %arg5[%c0, %c0_1] : memref<8x128xf32, #tpu.memory_space<vmem>>, vector<8x128xf32>
    %c0_2 = arith.constant 0 : index
    %c0_3 = arith.constant 0 : index
    %4 = vector.load %arg3[%c0_2, %c0_3] : memref<8x128xf32, #tpu.memory_space<vmem>>, vector<8x128xf32>
    %c0_4 = arith.constant 0 : index
    %c0_5 = arith.constant 0 : index
    %5 = vector.load %arg4[%c0_4, %c0_5] : memref<128x128xf32, #tpu.memory_space<vmem>>, vector<128x128xf32>
    %cst = arith.constant dense<0.000000e+00> : vector<8x128xf32>
    %6 = tpu.matmul %4, %5, %cst {dimension_numbers = #tpu.dot_dimension_numbers<[1], [0], [0], [1], [0, 0, 1, 1], [], []>} : vector<8x128xf32>, vector<128x128xf32>, vector<8x128xf32> -> vector<8x128xf32>
    %7 = arith.addf %3, %6 : vector<8x128xf32>
    %c0_6 = arith.constant 0 : index
    %c0_7 = arith.constant 0 : index
    %8 = vector.load %arg5[%c0_6, %c0_7] : memref<8x128xf32, #tpu.memory_space<vmem>>, vector<8x128xf32>
    tpu.vector_store %arg5[%c0_6, %c0_7], %7 {strides = array<i32>} : memref<8x128xf32, #tpu.memory_space<vmem>>, vector<8x128xf32>,
    %c0_i32_8 = arith.constant 0 : i32
    %9 = arith.cmpi eq, %arg2, %c0_i32_8 : i32
    %10 = arith.extui %9 : i1 to i32
    %c0_i32_9 = arith.constant 0 : i32
    %11 = arith.cmpi ne, %10, %c0_i32_9 : i32
    scf.if %11 {
      %c0_10 = arith.constant 0 : index
      %c0_11 = arith.constant 0 : index
      %12 = vector.load %arg5[%c0_10, %c0_11] : memref<8x128xf32, #tpu.memory_space<vmem>>, vector<8x128xf32>
      %cst_12 = arith.constant 5.000000e-01 : f32
      %13 = vector.broadcast %cst_12 : f32 to vector<8x128xf32>
      %14 = arith.mulf %12, %13 : vector<8x128xf32>
      %c0_13 = arith.constant 0 : index
      %c0_14 = arith.constant 0 : index
      %15 = vector.load %arg5[%c0_13, %c0_14] : memref<8x128xf32, #tpu.memory_space<vmem>>, vector<8x128xf32>
      tpu.vector_store %arg5[%c0_13, %c0_14], %14 {strides = array<i32>} : memref<8x128xf32, #tpu.memory_space<vmem>>, vector<8x128xf32>,
    } else {
    }
    return
  }
  func.func @transform_0(%arg0: i32, %arg1: i32, %arg2: i32) -> (i32, i32) {
    %c0_i32 = arith.constant 0 : i32
    return %arg0, %arg2 : i32, i32
  }
  func.func @transform_1(%arg0: i32, %arg1: i32, %arg2: i32) -> (i32, i32) {
    %c0_i32 = arith.constant 0 : i32
    return %arg2, %arg1 : i32, i32
  }
  func.func @transform_2(%arg0: i32, %arg1: i32, %arg2: i32) -> (i32, i32) {
    %c0_i32 = arith.constant 0 : i32
    return %arg0, %arg1 : i32, i32
  }
}

</mosaic_0001>

<llo_original>
// kernel: tpu_custom_call.1
$region0: #{tpu_custom_call.1}
  #allocation0 [shape = 'u32[]', space=smem, size = 0x4, offset = 0x4, fixed_abs, tag = 'smem constant byte address 0x4 - core index']
  #allocation1 [shape = 'u32[144,128]{1,0:T(1,128)}', space=vmem, size = 0x12000, scoped, tag = 'internal scratch']
  %s0 = inlined_call_operand.hbm [shape: f32[8,128], index: 0, kind: input, shape index: {}]
  %s1 = inlined_call_operand.hbm [shape: f32[128,128], index: 1, kind: input, shape index: {}]
  %s2 = inlined_call_operand.hbm [shape: f32[8,128], index: 2, kind: output, shape index: {}]
  %s3 = sld [smem:[#allocation0]]
  $region34: #{tpu_custom_call.1} parent=0
    _
  %s5 = ssub.s32 1, %s3
  %s6 = scalar_select 0, %s5, %s3
  $region1: #{tpu_custom_call.1} parent=0
    #allocation2 [shape = 'u8[4096]{0}', space=vmem, size = 0x1000, scoped, tag = 'input window, operand 0, single buffered']
    #allocation3 [shape = 's32[1]{0}', space=sflag, size = 0x4, scoped, tag = 'scoped memory for tpu_custom_call.1']
    #allocation4 [shape = 's32[1]{0}', space=sflag, size = 0x4, scoped, tag = 'scoped memory for tpu_custom_call.1']
    #allocation5 [shape = 'u8[65536]{0}', space=vmem, size = 0x10000, scoped, tag = 'input window, operand 1, single buffered']
    #allocation6 [shape = 's32[1]{0}', space=sflag, size = 0x4, scoped, tag = 'scoped memory for tpu_custom_call.1']
    #allocation7 [shape = 'u8[4096]{0}', space=vmem, size = 0x1000, scoped, tag = 'output window, operand 0, single buffered']
    %7 = vsyncpa [#allocation3], 0
    %8 = vsyncpa [#allocation6], 0
    %9 = vsyncpa [#allocation4], 0
    // Predicated region
    $region2: #{tpu_custom_call.1} parent=1 // pred_check
      _
    $region3: #{tpu_custom_call.1} parent=1 // pred_check_branch
      %11 = sbr.rel (0) target = $region5
    $region4: #{tpu_custom_call.1} parent=1 // pred_region
      %s13 = ssub.s32 128, 128
      %14 = vsyncadd [#allocation3], %s13
      %s16 = sshll.u32 [#allocation2], 4
      %s17 = int_to_ptr.vmem [resolvable:$true] %s16
      %19 = dma.hbm_to_vmem [thread:$0]  %s0, 128, %s17, [#allocation3]
    $region5: #{tpu_custom_call.1} parent=1 // pred_fallthru
      _
    // Predicated region
    $region6: #{tpu_custom_call.1} parent=1 // pred_check
      _
    $region7: #{tpu_custom_call.1} parent=1 // pred_check_branch
      %21 = sbr.rel (0) target = $region9
    $region8: #{tpu_custom_call.1} parent=1 // pred_region
      %s23 = ssub.s32 2048, 2048
      %24 = vsyncadd [#allocation6], %s23
      %s25 = sshll.u32 [#allocation5], 4
      %s26 = int_to_ptr.vmem [resolvable:$true] %s25
      %31 = dma.hbm_to_vmem [thread:$0]  %s1, 2048, %s26, [#allocation6], 128, 128, 8
    $region9: #{tpu_custom_call.1} parent=1 // pred_fallthru
      _
    // Predicated region
    $region10: #{tpu_custom_call.1} parent=1 // pred_check
      _
    $region11: #{tpu_custom_call.1} parent=1 // pred_check_branch
      %33 = sbr.rel (0) target = $region13
    $region12: #{tpu_custom_call.1} parent=1 // pred_region
      %34 = dma.done [#allocation3], 128
    $region13: #{tpu_custom_call.1} parent=1 // pred_fallthru
      _
    // Predicated region
    $region14: #{tpu_custom_call.1} parent=1 // pred_check
      _
    $region15: #{tpu_custom_call.1} parent=1 // pred_check_branch
      %36 = sbr.rel (0) target = $region17
    $region16: #{tpu_custom_call.1} parent=1 // pred_region
      %37 = dma.done [#allocation6], 2048
    $region17: #{tpu_custom_call.1} parent=1 // pred_fallthru
      _
    %p38 = scmp.eq.s32.totalorder 0, 0
    // Predicated region
    $region18: #{tpu_custom_call.1} parent=1 // pred_check
      %p39 = pneg %p38
    $region19: #{tpu_custom_call.1} parent=1 // pred_check_branch
      %41 = sbr.rel (%p39) target = $region21
    $region20: #{tpu_custom_call.1} parent=1 // pred_region
      %42 = vst [vmem:[#allocation7] sm:$0xff] 0.0
    $region21: #{tpu_custom_call.1} parent=1 // pred_fallthru
      _
    %v43 = vld [vmem:[#allocation7] sm:$0xff]
    %v44 = vld [vmem:[#allocation2] sm:$0xff]
    %v45 = vld [vmem:[#allocation5] sm:$0xff]
    %v46 = vld [vmem:[#allocation5 + $0x8] sm:$0xff]
    %v47 = vld [vmem:[#allocation5 + $0x10] sm:$0xff]
    %v48 = vld [vmem:[#allocation5 + $0x18] sm:$0xff]
    %v49 = vld [vmem:[#allocation5 + $0x20] sm:$0xff]
    %v50 = vld [vmem:[#allocation5 + $0x28] sm:$0xff]
    %v51 = vld [vmem:[#allocation5 + $0x30] sm:$0xff]
    %v52 = vld [vmem:[#allocation5 + $0x38] sm:$0xff]
    %v53 = vld [vmem:[#allocation5 + $0x40] sm:$0xff]
    %v54 = vld [vmem:[#allocation5 + $0x48] sm:$0xff]
    %v55 = vld [vmem:[#allocation5 + $0x50] sm:$0xff]
    %v56 = vld [vmem:[#allocation5 + $0x58] sm:$0xff]
    %v57 = vld [vmem:[#allocation5 + $0x60] sm:$0xff]
    %v58 = vld [vmem:[#allocation5 + $0x68] sm:$0xff]
    %v59 = vld [vmem:[#allocation5 + $0x70] sm:$0xff]
    %v60 = vld [vmem:[#allocation5 + $0x78] sm:$0xff]
    %61 = vmatprep.subr.mxu0 0.0
    %62 = vmatpush1.msra.mxu0 %v45
    %63 = vmatprep.subr.mxu0 0.0
    %64 = vmatpush1.msra.mxu0 %v46
    %65 = vmatprep.subr.mxu0 0.0
    %66 = vmatpush1.msra.mxu0 %v47
    %67 = vmatprep.subr.mxu0 0.0
    %68 = vmatpush1.msra.mxu0 %v48
    %69 = vmatprep.subr.mxu0 0.0
    %70 = vmatpush1.msra.mxu0 %v49
    %71 = vmatprep.subr.mxu0 0.0
    %72 = vmatpush1.msra.mxu0 %v50
    %73 = vmatprep.subr.mxu0 0.0
    %74 = vmatpush1.msra.mxu0 %v51
    %75 = vmatprep.subr.mxu0 0.0
    %76 = vmatpush1.msra.mxu0 %v52
    %77 = vmatprep.subr.mxu0 0.0
    %78 = vmatpush1.msra.mxu0 %v53
    %79 = vmatprep.subr.mxu0 0.0
    %80 = vmatpush1.msra.mxu0 %v54
    %81 = vmatprep.subr.mxu0 0.0
    %82 = vmatpush1.msra.mxu0 %v55
    %83 = vmatprep.subr.mxu0 0.0
    %84 = vmatpush1.msra.mxu0 %v56
    %85 = vmatprep.subr.mxu0 0.0
    %86 = vmatpush1.msra.mxu0 %v57
    %87 = vmatprep.subr.mxu0 0.0
    %88 = vmatpush1.msra.mxu0 %v58
    %89 = vmatprep.subr.mxu0 0.0
    %90 = vmatpush1.msra.mxu0 %v59
    %91 = vmatprep.subr.mxu0 0.0
    %92 = vmatpush1.msra.mxu0 %v60
    %93 = vmatprep.subr.mxu0 0.0
    %94 = vmatpush1.msra.mxu0 0.0
    %95 = vmatprep.subr.mxu0 0.0
    %96 = vmatpush1.msra.mxu0 0.0
    %97 = vmatprep.subr.mxu0 0.0
    %98 = vmatpush1.msra.mxu0 0.0
    %99 = vmatprep.subr.mxu0 0.0
    %100 = vmatpush1.msra.mxu0 0.0
    %101 = vmatprep.subr.mxu0 0.0
    %102 = vmatpush1.msra.mxu0 0.0
    %103 = vmatprep.subr.mxu0 0.0
    %104 = vmatpush1.msra.mxu0 0.0
    %105 = vmatprep.subr.mxu0 0.0
    %106 = vmatpush1.msra.mxu0 0.0
    %107 = vmatprep.subr.mxu0 0.0
    %108 = vmatpush1.msra.mxu0 0.0
    %109 = vmatprep.subr.mxu0 0.0
    %110 = vmatpush1.msra.mxu0 0.0
    %111 = vmatprep.subr.mxu0 0.0
    %112 = vmatpush1.msra.mxu0 0.0
    %113 = vmatprep.subr.mxu0 0.0
    %114 = vmatpush1.msra.mxu0 0.0
    %115 = vmatprep.subr.mxu0 0.0
    %116 = vmatpush1.msra.mxu0 0.0
    %117 = vmatprep.subr.mxu0 0.0
    %118 = vmatpush1.msra.mxu0 0.0
    %119 = vmatprep.subr.mxu0 0.0
    %120 = vmatpush1.msra.mxu0 0.0
    %121 = vmatprep.subr.mxu0 0.0
    %122 = vmatpush1.msra.mxu0 0.0
    %123 = vmatprep.subr.mxu0 0.0
    %124 = vmatpush1.msra.mxu0 0.0
    %125 = vmatprep.mubr.f32.mxu0 0.0
    %126 = vmatmul.mubr.f32.gmra.mrb[0].mxu0 %v44
    %v127 = vpop.f32.mrb[0].mxu0
    %v128 = vadd.f32 0.0, %v127
    %v129 = vpop.f32.mrb[0].mxu0
    %130 = vdwg.mxu0
    %v131 = vadd.f32 %v43, %v128
    %132 = vst [vmem:[#allocation7] sm:$0xff] %v131
    // Predicated region
    $region22: #{tpu_custom_call.1} parent=1 // pred_check
      %p133 = pneg %p38
    $region23: #{tpu_custom_call.1} parent=1 // pred_check_branch
      %135 = sbr.rel (%p133) target = $region25
    $region24: #{tpu_custom_call.1} parent=1 // pred_region
      %v136 = vld [vmem:[#allocation7] sm:$0xff]
      %v137 = vmul.f32 %v136, 0.5
      %138 = vst [vmem:[#allocation7] sm:$0xff] %v137
    $region25: #{tpu_custom_call.1} parent=1 // pred_fallthru
      _
    // Predicated region
    $region26: #{tpu_custom_call.1} parent=1 // pred_check
      _
    $region27: #{tpu_custom_call.1} parent=1 // pred_check_branch
      %140 = sbr.rel (0) target = $region29
    $region28: #{tpu_custom_call.1} parent=1 // pred_region
      %s142 = ssub.s32 128, 128
      %143 = vsyncadd [#allocation4], %s142
      %s145 = sshll.u32 [#allocation7], 4
      %s146 = int_to_ptr.vmem [resolvable:$true] %s145
      %148 = dma.vmem_to_hbm [thread:$0]  %s146, 128, %s2, [#allocation4]
    $region29: #{tpu_custom_call.1} parent=1 // pred_fallthru
      _
    // Predicated region
    $region30: #{tpu_custom_call.1} parent=1 // pred_check
      _
    $region31: #{tpu_custom_call.1} parent=1 // pred_check_branch
      %150 = sbr.rel (0) target = $region33
    $region32: #{tpu_custom_call.1} parent=1 // pred_region
      %151 = dma.done [#allocation4], 128
    $region33: #{tpu_custom_call.1} parent=1 // pred_fallthru
      _
    %152 = vsyncpa [#allocation3], 1
    %153 = vsyncpa [#allocation6], 1
    %154 = vsyncpa [#allocation4], 1

</llo_original>
